<compile_context>
chip_gen: v6e
topology: v6e:2x2x1
jax: 0.10.0
libtpu: 0.0.40
codegen_flags: <defaults>
</compile_context>

<pallas_src>
import jax
import jax.numpy as jnp
from jax.experimental import pallas as pl
from jax.experimental.pallas import tpu as pltpu  # noqa: F401  (no TPU-specific params needed for a single-program kernel)

# ----------------------------- model hyper-params ----------------------------
VOCAB = 65
VOCAB_PAD = 128            # lane-dense LM-head width (padded, sliced in the wrapper)
BLOCK_SIZE = 8             # T
N_EMBED = 32               # C
NUM_HEADS = 4              # H
HEAD = N_EMBED // NUM_HEADS
BATCH = 2                  # B
BT = BATCH * BLOCK_SIZE    # 16  rows (b*T + t)
HBT = NUM_HEADS * BT       # 64  head-stacked rows (h*BT + b*T + t)
HC = NUM_HEADS * N_EMBED   # 128 block-diagonal channel width


# ------------------------------- Pallas kernel --------------------------------
def attention_lm_kernel(xbd_ref, xtm_ref, w1_ref, fc_ref, out_ref):
    """Single-program fused forward.

    xbd_ref : (64, 128)  x in per-head block-diagonal layout:
                         rows h*16 + (b*8+t), lanes h*32..h*32+32 hold x[b,t,:]
    xtm_ref : (192, 64)  rows 0:128  = x_bd^T
                         rows 128:192 = additive causal/segment mask {0, -1e30}
    w1_ref  : (128, 160) [ M_bd | Wv_bd ]  (block-diag scale*Wq_h@Wk_h^T and Wv_h)
    fc_ref  : (33, 128)  rows 0:32 = wo @ fcw (vocab-padded), row 32 = bo@fcw + fc_b
    out_ref : (16, 128)  padded logits, rows ordered b*T + t (lane-dense store)
    """
    xbd = xbd_ref[...]                                                 # (64, 128)

    # MXU #1: one matmul yields both x@M (head-stacked, block-diag lanes) and the
    # head-stacked v. K = 128 exactly fills a 128-deep MXU pass.
    r1 = jnp.dot(xbd, w1_ref[...], preferred_element_type=jnp.float32)  # (64, 160)
    xm = r1[:, :HC]                 # (64, 128)  vreg-aligned lane slice
    v_bd = r1[:, HC:]               # (64, 32)   v_h in lanes h*8..h*8+8, else 0

    xbd_t = xtm_ref[0:HC, :]        # (128, 64)
    mask = xtm_ref[HC:HC + HBT, :]  # (64, 64)   additive constant

    # MXU #2: attention scores for all heads; cross-head entries are exact zeros
    # and (with cross-batch entries) are killed by the additive mask.
    att = jnp.dot(xm, xbd_t, preferred_element_type=jnp.float32) + mask  # (64, 64)

    att = att - jnp.max(att, axis=-1, keepdims=True)
    e = jnp.exp(att)
    # exact reciprocal; this single op is nowhere near the critical slot here.
    p = e * pl.reciprocal(jnp.sum(e, axis=-1, keepdims=True), approx=False)

    # MXU #3: per-head outputs land in disjoint lane blocks (v_bd is block-diag),
    # so summing the 4 head row-blocks IS the concat-heads result.
    o_tmp = jnp.dot(p, v_bd, preferred_element_type=jnp.float32)        # (64, 32)
    o = (o_tmp[0 * BT:1 * BT] + o_tmp[1 * BT:2 * BT]
         + o_tmp[2 * BT:3 * BT] + o_tmp[3 * BT:4 * BT])                  # (16, 32)

    # MXU #4: LM head with Wo/bo pre-folded; lane-dense 128-wide store.
    logits = jnp.dot(o, fc_ref[0:N_EMBED, :],
                     preferred_element_type=jnp.float32) + fc_ref[N_EMBED:N_EMBED + 1, :]
    out_ref[...] = logits


# ------------------------------ packing helpers --------------------------------
def _block_diag(blocks):
    rows = sum(b.shape[0] for b in blocks)
    cols = sum(b.shape[1] for b in blocks)
    out = jnp.zeros((rows, cols), jnp.float32)
    r0 = c0 = 0
    for b in blocks:
        out = out.at[r0:r0 + b.shape[0], c0:c0 + b.shape[1]].set(b)
        r0 += b.shape[0]
        c0 += b.shape[1]
    return out


# ---------------------------------- wrapper ------------------------------------
@jax.jit
def bigram_lm_v5_forward(index, params):
    """index: (B, T) int32 token ids -> logits (B, T, VOCAB) float32."""
    B, T = index.shape
    assert T == BLOCK_SIZE and B == BATCH

    # Embedding gathers stay in plain JAX (tiny data-dependent gathers = glue).
    tok = params["tok_emb"][index]                                   # (B, T, C)
    pos = params["pos_emb"][jnp.arange(T)]                           # (T, C)
    x = (tok + pos).astype(jnp.float32).reshape(B * T, N_EMBED)      # (16, 32)

    # ---- activation layout plumbing: per-head block-diagonal x (64, 128) ----
    x_bd = _block_diag([x] * NUM_HEADS)                              # (64, 128)

    # Additive causal/segment mask (pure constant -> folded by XLA).
    r = jnp.arange(HBT)[:, None]
    c = jnp.arange(HBT)[None, :]
    mask = jnp.where((r // BLOCK_SIZE == c // BLOCK_SIZE) & (c <= r),
                     0.0, -1e30).astype(jnp.float32)                 # (64, 64)
    xtm = jnp.concatenate([x_bd.T, mask], axis=0)                    # (192, 64)

    # ---- weight packing (constant-folded / precomputed once in deployment) ----
    # All Linear weights are stored (in, out), i.e. pre-transposed vs nn.Linear.
    scale = HEAD ** -0.5
    m_blocks, v_blocks = [], []
    for h in range(NUM_HEADS):
        s = slice(h * HEAD, (h + 1) * HEAD)
        m_blocks.append(scale * (params["wq"][:, s] @ params["wk"][:, s].T))  # (32, 32)
        v_blocks.append(params["wv"][:, s])                                   # (32, 8)
    m_bd = _block_diag(m_blocks)                                     # (128, 128)
    wv_bd = _block_diag(v_blocks)                                    # (128, 32)
    w1 = jnp.concatenate([m_bd, wv_bd], axis=1)                      # (128, 160)

    fcw_pad = jnp.zeros((N_EMBED, VOCAB_PAD), jnp.float32).at[:, :VOCAB].set(params["fc_w"])
    fcb_pad = jnp.zeros((VOCAB_PAD,), jnp.float32).at[:VOCAB].set(params["fc_b"])
    fcw2 = params["wo"] @ fcw_pad                                    # (32, 128)  Wo fold
    fcb2 = params["bo"] @ fcw_pad + fcb_pad                          # (128,)     bo fold
    fc_pack = jnp.concatenate([fcw2, fcb2[None, :]], axis=0)         # (33, 128)

    out = pl.pallas_call(
        attention_lm_kernel,
        out_shape=jax.ShapeDtypeStruct((B * T, VOCAB_PAD), jnp.float32),
        # No grid: a single program; every operand is mapped whole into VMEM
        # (single-buffered, one DMA descriptor each). Total footprint < 100 KiB,
        # comfortably under the scoped-VMEM default on v5e/v6e/v7x.
    )(x_bd, xtm, w1, fc_pack)

    return out.reshape(B, T, VOCAB_PAD)[:, :, :VOCAB]


# ---------------------------- pure-JAX reference --------------------------------
def reference_forward(index, params):
    tok = params["tok_emb"][index]
    pos = params["pos_emb"][jnp.arange(index.shape[1])]
    x = (tok + pos).astype(jnp.float32)                              # (B, T, C)
    q = x @ params["wq"]
    k = x @ params["wk"]
    v = x @ params["wv"]
    T = x.shape[1]
    causal = jnp.tril(jnp.ones((T, T), dtype=bool))
    scale = HEAD ** -0.5
    heads = []
    for h in range(NUM_HEADS):
        s = slice(h * HEAD, (h + 1) * HEAD)
        att = (q[..., s] @ jnp.swapaxes(k[..., s], -1, -2)) * scale
        att = jnp.where(causal, att, -jnp.inf)
        p = jax.nn.softmax(att, axis=-1)
        heads.append(p @ v[..., s])
    sa = jnp.concatenate(heads, axis=-1) @ params["wo"] + params["bo"]
    return sa @ params["fc_w"] + params["fc_b"]


# ---------------------------- deterministic init ---------------------------------
def init_params(key):
    ks = jax.random.split(key, 9)
    rnd = lambda k, shape, s: s * jax.random.normal(k, shape, dtype=jnp.float32)
    return {
        "tok_emb": rnd(ks[0], (VOCAB, N_EMBED), 1.0),
        "pos_emb": rnd(ks[1], (BLOCK_SIZE, N_EMBED), 1.0),
        "wq": rnd(ks[2], (N_EMBED, N_EMBED), 0.2),
        "wk": rnd(ks[3], (N_EMBED, N_EMBED), 0.2),
        "wv": rnd(ks[4], (N_EMBED, N_EMBED), 0.2),
        "wo": rnd(ks[5], (N_EMBED, N_EMBED), 0.2),
        "bo": rnd(ks[6], (N_EMBED,), 0.1),
        "fc_w": rnd(ks[7], (N_EMBED, VOCAB), 0.2),
        "fc_b": rnd(ks[8], (VOCAB,), 0.1),
    }


if __name__ == "__main__":
    key = jax.random.PRNGKey(0)
    pkey, ikey = jax.random.split(key)
    params = init_params(pkey)
    index = jax.random.randint(ikey, (BATCH, BLOCK_SIZE), 0, VOCAB, dtype=jnp.int32)

    logits = bigram_lm_v5_forward(index, params)
    logits = jax.block_until_ready(logits)

    ref = reference_forward(index, params)
    assert logits.shape == (BATCH, BLOCK_SIZE, VOCAB)
    # Tolerance loosened slightly (1e-3) to absorb fp reassociation from the
    # Wq@Wk^T and Wo->LM-head weight folds (mathematically exact).
    assert jnp.allclose(logits, ref, rtol=1e-3, atol=1e-3), "kernel mismatch vs reference"
    print("KERNEL_OK")
</pallas_src>

<mosaic_0001>
module attributes {stable_mosaic.version = 11 : i64} {
  func.func @attention_lm_kernel(%arg0: memref<64x128xf32, #tpu.memory_space<vmem>>, %arg1: memref<192x64xf32, #tpu.memory_space<vmem>>, %arg2: memref<128x160xf32, #tpu.memory_space<vmem>>, %arg3: memref<33x128xf32, #tpu.memory_space<vmem>>, %arg4: memref<16x128xf32, #tpu.memory_space<vmem>>) attributes {dimension_semantics = [], scalar_prefetch = 0 : i64, scratch_operands = 0 : i64, tpu.core_type = #tpu.core_type<tc>} {
    %c0 = arith.constant 0 : index
    %c0_0 = arith.constant 0 : index
    %0 = vector.load %arg0[%c0, %c0_0] : memref<64x128xf32, #tpu.memory_space<vmem>>, vector<64x128xf32>
    %c0_1 = arith.constant 0 : index
    %c0_2 = arith.constant 0 : index
    %1 = vector.load %arg2[%c0_1, %c0_2] : memref<128x160xf32, #tpu.memory_space<vmem>>, vector<128x160xf32>
    %cst = arith.constant dense<0.000000e+00> : vector<64x160xf32>
    %2 = tpu.matmul %0, %1, %cst {dimension_numbers = #tpu.dot_dimension_numbers<[1], [0], [0], [1], [0, 0, 1, 1], [], []>} : vector<64x128xf32>, vector<128x160xf32>, vector<64x160xf32> -> vector<64x160xf32>
    %3 = vector.extract_strided_slice %2 {offsets = [0, 0], sizes = [64, 128], strides = [1, 1]} : vector<64x160xf32> to vector<64x128xf32>
    %4 = vector.extract_strided_slice %2 {offsets = [0, 128], sizes = [64, 32], strides = [1, 1]} : vector<64x160xf32> to vector<64x32xf32>
    %c0_3 = arith.constant 0 : index
    %c0_4 = arith.constant 0 : index
    %5 = vector.load %arg1[%c0_3, %c0_4] : memref<192x64xf32, #tpu.memory_space<vmem>>, vector<128x64xf32>
    %c128 = arith.constant 128 : index
    %c0_5 = arith.constant 0 : index
    %6 = vector.load %arg1[%c128, %c0_5] : memref<192x64xf32, #tpu.memory_space<vmem>>, vector<64x64xf32>
    %cst_6 = arith.constant dense<0.000000e+00> : vector<64x64xf32>
    %7 = tpu.matmul %3, %5, %cst_6 {dimension_numbers = #tpu.dot_dimension_numbers<[1], [0], [0], [1], [0, 0, 1, 1], [], []>} : vector<64x128xf32>, vector<128x64xf32>, vector<64x64xf32> -> vector<64x64xf32>
    %8 = arith.addf %7, %6 : vector<64x64xf32>
    %cst_7 = arith.constant dense<0xFF800000> : vector<64xf32>
    %9 = vector.multi_reduction <maximumf>, %8, %cst_7 [1] : vector<64x64xf32> to vector<64xf32>
    %10 = vector.shape_cast %9 : vector<64xf32> to vector<64x1xf32>
    %11 = vector.broadcast %10 : vector<64x1xf32> to vector<64x64xf32>
    %12 = arith.subf %8, %11 : vector<64x64xf32>
    %13 = math.exp %12 : vector<64x64xf32>
    %cst_8 = arith.constant dense<0.000000e+00> : vector<64xf32>
    %14 = vector.multi_reduction <add>, %13, %cst_8 [1] : vector<64x64xf32> to vector<64xf32>
    %15 = vector.shape_cast %14 : vector<64xf32> to vector<64x1xf32>
    %16 = tpu.reciprocal %15 : vector<64x1xf32> -> vector<64x1xf32>
    %17 = vector.broadcast %16 : vector<64x1xf32> to vector<64x64xf32>
    %18 = arith.mulf %13, %17 : vector<64x64xf32>
    %cst_9 = arith.constant dense<0.000000e+00> : vector<64x32xf32>
    %19 = tpu.matmul %18, %4, %cst_9 {dimension_numbers = #tpu.dot_dimension_numbers<[1], [0], [0], [1], [0, 0, 1, 1], [], []>} : vector<64x64xf32>, vector<64x32xf32>, vector<64x32xf32> -> vector<64x32xf32>
    %20 = vector.extract_strided_slice %19 {offsets = [0, 0], sizes = [16, 32], strides = [1, 1]} : vector<64x32xf32> to vector<16x32xf32>
    %21 = vector.extract_strided_slice %19 {offsets = [16, 0], sizes = [16, 32], strides = [1, 1]} : vector<64x32xf32> to vector<16x32xf32>
    %22 = arith.addf %20, %21 : vector<16x32xf32>
    %23 = vector.extract_strided_slice %19 {offsets = [32, 0], sizes = [16, 32], strides = [1, 1]} : vector<64x32xf32> to vector<16x32xf32>
    %24 = arith.addf %22, %23 : vector<16x32xf32>
    %25 = vector.extract_strided_slice %19 {offsets = [48, 0], sizes = [16, 32], strides = [1, 1]} : vector<64x32xf32> to vector<16x32xf32>
    %26 = arith.addf %24, %25 : vector<16x32xf32>
    %c0_10 = arith.constant 0 : index
    %c0_11 = arith.constant 0 : index
    %27 = vector.load %arg3[%c0_10, %c0_11] : memref<33x128xf32, #tpu.memory_space<vmem>>, vector<32x128xf32>
    %cst_12 = arith.constant dense<0.000000e+00> : vector<16x128xf32>
    %28 = tpu.matmul %26, %27, %cst_12 {dimension_numbers = #tpu.dot_dimension_numbers<[1], [0], [0], [1], [0, 0, 1, 1], [], []>} : vector<16x32xf32>, vector<32x128xf32>, vector<16x128xf32> -> vector<16x128xf32>
    %c32 = arith.constant 32 : index
    %c0_13 = arith.constant 0 : index
    %29 = vector.load %arg3[%c32, %c0_13] : memref<33x128xf32, #tpu.memory_space<vmem>>, vector<1x128xf32>
    %30 = vector.broadcast %29 : vector<1x128xf32> to vector<16x128xf32>
    %31 = arith.addf %28, %30 : vector<16x128xf32>
    %c0_14 = arith.constant 0 : index
    %c0_15 = arith.constant 0 : index
    %32 = vector.load %arg4[%c0_14, %c0_15] : memref<16x128xf32, #tpu.memory_space<vmem>>, vector<16x128xf32>
    tpu.vector_store %arg4[%c0_14, %c0_15], %31 {strides = array<i32>} : memref<16x128xf32, #tpu.memory_space<vmem>>, vector<16x128xf32>,
    return
  }
}

</mosaic_0001>

<llo_original>
// kernel: bigram_lm_v5_forward.1
$region0: #{bigram_lm_v5_forward.1}
  #allocation0 [shape = 'u32[]', space=smem, size = 0x4, offset = 0x4, fixed_abs, tag = 'smem constant byte address 0x4 - core index']
  #allocation1 [shape = 'u32[144,128]{1,0:T(1,128)}', space=vmem, size = 0x12000, scoped, tag = 'internal scratch']
  %s0 = inlined_call_operand.vmem [shape: f32[64,128], index: 0, kind: input, shape index: {}]
  %s1 = inlined_call_operand.vmem [shape: f32[192,64], index: 1, kind: input, shape index: {}]
  %s2 = inlined_call_operand.vmem [shape: f32[128,160], index: 2, kind: input, shape index: {}]
  %s3 = inlined_call_operand.vmem [shape: f32[33,128], index: 3, kind: input, shape index: {}]
  %s4 = inlined_call_operand.hbm [shape: f32[16,128], index: 4, kind: output, shape index: {}]
  %s5 = sld [smem:[#allocation0]]
  $region26: #{bigram_lm_v5_forward.1} parent=0
    _
  %s7 = ssub.s32 1, %s5
  %s8 = scalar_select 0, %s7, %s5
  $region1: #{bigram_lm_v5_forward.1} parent=0
    #allocation2 [shape = 'u8[8192]{0}', space=vmem, size = 0x2000, scoped, tag = 'output window, operand 0, single buffered']
    #allocation3 [shape = 's32[1]{0}', space=sflag, size = 0x4, scoped, tag = 'scoped memory for bigram_lm_v5_forward.1']
    %9 = vsyncpa [#allocation3], 0
    // Predicated region
    $region2: #{bigram_lm_v5_forward.1} parent=1 // pred_check
      _
    $region3: #{bigram_lm_v5_forward.1} parent=1 // pred_check_branch
      %11 = sbr.rel (0) target = $region5
    $region4: #{bigram_lm_v5_forward.1} parent=1 // pred_region
      _
    $region5: #{bigram_lm_v5_forward.1} parent=1 // pred_fallthru
      _
    // Predicated region
    $region6: #{bigram_lm_v5_forward.1} parent=1 // pred_check
      _
    $region7: #{bigram_lm_v5_forward.1} parent=1 // pred_check_branch
      %13 = sbr.rel (0) target = $region9
    $region8: #{bigram_lm_v5_forward.1} parent=1 // pred_region
      _
    $region9: #{bigram_lm_v5_forward.1} parent=1 // pred_fallthru
      _
    // Predicated region
    $region10: #{bigram_lm_v5_forward.1} parent=1 // pred_check
      _
    $region11: #{bigram_lm_v5_forward.1} parent=1 // pred_check_branch
      %15 = sbr.rel (0) target = $region13
    $region12: #{bigram_lm_v5_forward.1} parent=1 // pred_region
      _
    $region13: #{bigram_lm_v5_forward.1} parent=1 // pred_fallthru
      _
    // Predicated region
    $region14: #{bigram_lm_v5_forward.1} parent=1 // pred_check
      _
    $region15: #{bigram_lm_v5_forward.1} parent=1 // pred_check_branch
      %17 = sbr.rel (0) target = $region17
    $region16: #{bigram_lm_v5_forward.1} parent=1 // pred_region
      _
    $region17: #{bigram_lm_v5_forward.1} parent=1 // pred_fallthru
      _
    %v18 = vld [vmem:[%s0] sm:$0xff]
    %v19 = vld [vmem:[%s0 + $0x8] sm:$0xff]
    %v20 = vld [vmem:[%s0 + $0x10] sm:$0xff]
    %v21 = vld [vmem:[%s0 + $0x18] sm:$0xff]
    %v22 = vld [vmem:[%s0 + $0x20] sm:$0xff]
    %v23 = vld [vmem:[%s0 + $0x28] sm:$0xff]
    %v24 = vld [vmem:[%s0 + $0x30] sm:$0xff]
    %v25 = vld [vmem:[%s0 + $0x38] sm:$0xff]
    %v26 = vld [vmem:[%s2] sm:$0xff]
    %v27 = vld [vmem:[%s2 + $0x8] sm:$0xff]
    %v28 = vld [vmem:[%s2 + $0x10] sm:$0xff]
    %v29 = vld [vmem:[%s2 + $0x18] sm:$0xff]
    %v30 = vld [vmem:[%s2 + $0x20] sm:$0xff]
    %v31 = vld [vmem:[%s2 + $0x28] sm:$0xff]
    %v32 = vld [vmem:[%s2 + $0x30] sm:$0xff]
    %v33 = vld [vmem:[%s2 + $0x38] sm:$0xff]
    %v34 = vld [vmem:[%s2 + $0x40] sm:$0xff]
    %v35 = vld [vmem:[%s2 + $0x48] sm:$0xff]
    %v36 = vld [vmem:[%s2 + $0x50] sm:$0xff]
    %v37 = vld [vmem:[%s2 + $0x58] sm:$0xff]
    %v38 = vld [vmem:[%s2 + $0x60] sm:$0xff]
    %v39 = vld [vmem:[%s2 + $0x68] sm:$0xff]
    %v40 = vld [vmem:[%s2 + $0x70] sm:$0xff]
    %v41 = vld [vmem:[%s2 + $0x78] sm:$0xff]
    %v42 = vld [vmem:[%s2 + $0x80] sm:$0xff]
    %v43 = vld [vmem:[%s2 + $0x88] sm:$0xff]
    %v44 = vld [vmem:[%s2 + $0x90] sm:$0xff]
    %v45 = vld [vmem:[%s2 + $0x98] sm:$0xff]
    %v46 = vld [vmem:[%s2 + $0xa0] sm:$0xff]
    %v47 = vld [vmem:[%s2 + $0xa8] sm:$0xff]
    %v48 = vld [vmem:[%s2 + $0xb0] sm:$0xff]
    %v49 = vld [vmem:[%s2 + $0xb8] sm:$0xff]
    %v50 = vld [vmem:[%s2 + $0xc0] sm:$0xff]
    %v51 = vld [vmem:[%s2 + $0xc8] sm:$0xff]
    %v52 = vld [vmem:[%s2 + $0xd0] sm:$0xff]
    %v53 = vld [vmem:[%s2 + $0xd8] sm:$0xff]
    %v54 = vld [vmem:[%s2 + $0xe0] sm:$0xff]
    %v55 = vld [vmem:[%s2 + $0xe8] sm:$0xff]
    %v56 = vld [vmem:[%s2 + $0xf0] sm:$0xff]
    %v57 = vld [vmem:[%s2 + $0xf8] sm:$0xff]
    %58 = vmatprep.subr.mxu0 %v57
    %59 = vmatpush1.msra.mxu0 %v56
    %60 = vmatprep.subr.mxu0 %v55
    %61 = vmatpush1.msra.mxu0 %v54
    %62 = vmatprep.subr.mxu0 %v53
    %63 = vmatpush1.msra.mxu0 %v52
    %64 = vmatprep.subr.mxu0 %v51
    %65 = vmatpush1.msra.mxu0 %v50
    %66 = vmatprep.subr.mxu0 %v49
    %67 = vmatpush1.msra.mxu0 %v48
    %68 = vmatprep.subr.mxu0 %v47
    %69 = vmatpush1.msra.mxu0 %v46
    %70 = vmatprep.subr.mxu0 %v45
    %71 = vmatpush1.msra.mxu0 %v44
    %72 = vmatprep.subr.mxu0 %v43
    %73 = vmatpush1.msra.mxu0 %v42
    %74 = vmatprep.subr.mxu0 %v41
    %75 = vmatpush1.msra.mxu0 %v40
    %76 = vmatprep.subr.mxu0 %v39
    %77 = vmatpush1.msra.mxu0 %v38
    %78 = vmatprep.subr.mxu0 %v37
    %79 = vmatpush1.msra.mxu0 %v36
    %80 = vmatprep.subr.mxu0 %v35
    %81 = vmatpush1.msra.mxu0 %v34
    %82 = vmatprep.subr.mxu0 %v33
    %83 = vmatpush1.msra.mxu0 %v32
    %84 = vmatprep.subr.mxu0 %v31
    %85 = vmatpush1.msra.mxu0 %v30
    %86 = vmatprep.subr.mxu0 %v29
    %87 = vmatpush1.msra.mxu0 %v28
    %88 = vmatprep.subr.mxu0 %v27
    %89 = vmatpush1.msra.mxu0 %v26
    %90 = vmatprep.subr.mxu0 0.0
    %91 = vmatpush2.msra.mxu0 0.0
    %92 = vmatprep.subr.mxu0 0.0
    %93 = vmatpush2.msra.mxu0 0.0
    %94 = vmatprep.subr.mxu0 0.0
    %95 = vmatpush2.msra.mxu0 0.0
    %96 = vmatprep.subr.mxu0 0.0
    %97 = vmatpush2.msra.mxu0 0.0
    %98 = vmatprep.subr.mxu0 0.0
    %99 = vmatpush2.msra.mxu0 0.0
    %100 = vmatprep.subr.mxu0 0.0
    %101 = vmatpush2.msra.mxu0 0.0
    %102 = vmatprep.subr.mxu0 0.0
    %103 = vmatpush2.msra.mxu0 0.0
    %104 = vmatprep.subr.mxu0 0.0
    %105 = vmatpush2.msra.mxu0 0.0
    %106 = vmatprep.subr.mxu0 0.0
    %107 = vmatpush2.msra.mxu0 0.0
    %108 = vmatprep.subr.mxu0 0.0
    %109 = vmatpush2.msra.mxu0 0.0
    %110 = vmatprep.subr.mxu0 0.0
    %111 = vmatpush2.msra.mxu0 0.0
    %112 = vmatprep.subr.mxu0 0.0
    %113 = vmatpush2.msra.mxu0 0.0
    %114 = vmatprep.subr.mxu0 0.0
    %115 = vmatpush2.msra.mxu0 0.0
    %116 = vmatprep.subr.mxu0 0.0
    %117 = vmatpush2.msra.mxu0 0.0
    %118 = vmatprep.subr.mxu0 0.0
    %119 = vmatpush2.msra.mxu0 0.0
    %120 = vmatprep.subr.mxu0 0.0
    %121 = vmatpush2.msra.mxu0 0.0
    %122 = vmatprep.mubr.f32.mxu0 0.0
    %123 = vmatmul.mubr.f32.gmra.mxu0 %v18
    %v124 = vpop.f32.mrf.mxu0
    %v125 = vadd.f32 0.0, %v124
    %v126 = vpop.f32.mrf.mxu0
    %v127 = vadd.f32 0.0, %v126
    %128 = vmatprep.mubr.f32.mxu0 0.0
    %129 = vmatmul.mubr.f32.gmra.mxu0 %v19
    %v130 = vpop.f32.mrf.mxu0
    %v131 = vadd.f32 0.0, %v130
    %v132 = vpop.f32.mrf.mxu0
    %v133 = vadd.f32 0.0, %v132
    %134 = vmatprep.mubr.f32.mxu0 0.0
    %135 = vmatmul.mubr.f32.gmra.mxu0 %v20
    %v136 = vpop.f32.mrf.mxu0
    %v137 = vadd.f32 0.0, %v136
    %v138 = vpop.f32.mrf.mxu0
    %v139 = vadd.f32 0.0, %v138
    %140 = vmatprep.mubr.f32.mxu0 0.0
    %141 = vmatmul.mubr.f32.gmra.mxu0 %v21
    %v142 = vpop.f32.mrf.mxu0
    %v143 = vadd.f32 0.0, %v142
    %v144 = vpop.f32.mrf.mxu0
    %v145 = vadd.f32 0.0, %v144
    %146 = vmatprep.mubr.f32.mxu0 0.0
    %147 = vmatmul.mubr.f32.gmra.mxu0 %v22
    %v148 = vpop.f32.mrf.mxu0
    %v149 = vadd.f32 0.0, %v148
    %v150 = vpop.f32.mrf.mxu0
    %v151 = vadd.f32 0.0, %v150
    %152 = vmatprep.mubr.f32.mxu0 0.0
    %153 = vmatmul.mubr.f32.gmra.mxu0 %v23
    %v154 = vpop.f32.mrf.mxu0
    %v155 = vadd.f32 0.0, %v154
    %v156 = vpop.f32.mrf.mxu0
    %v157 = vadd.f32 0.0, %v156
    %158 = vmatprep.mubr.f32.mxu0 0.0
    %159 = vmatmul.mubr.f32.gmra.mxu0 %v24
    %v160 = vpop.f32.mrf.mxu0
    %v161 = vadd.f32 0.0, %v160
    %v162 = vpop.f32.mrf.mxu0
    %v163 = vadd.f32 0.0, %v162
    %164 = vmatprep.mubr.f32.mxu0 0.0
    %165 = vmatmul.mubr.f32.gmra.mxu0 %v25
    %v166 = vpop.f32.mrf.mxu0
    %v167 = vadd.f32 0.0, %v166
    %v168 = vpop.f32.mrf.mxu0
    %v169 = vadd.f32 0.0, %v168
    %170 = vdwg.mxu0
    %v171 = vld [vmem:[%s1] sm:$0xff]
    %v172 = vld [vmem:[%s1 + $0x8] sm:$0xff]
    %v173 = vld [vmem:[%s1 + $0x10] sm:$0xff]
    %v174 = vld [vmem:[%s1 + $0x18] sm:$0xff]
    %v175 = vld [vmem:[%s1 + $0x20] sm:$0xff]
    %v176 = vld [vmem:[%s1 + $0x28] sm:$0xff]
    %v177 = vld [vmem:[%s1 + $0x30] sm:$0xff]
    %v178 = vld [vmem:[%s1 + $0x38] sm:$0xff]
    %v179 = vld [vmem:[%s1 + $0x40] sm:$0xff]
    %v180 = vld [vmem:[%s1 + $0x48] sm:$0xff]
    %v181 = vld [vmem:[%s1 + $0x50] sm:$0xff]
    %v182 = vld [vmem:[%s1 + $0x58] sm:$0xff]
    %v183 = vld [vmem:[%s1 + $0x60] sm:$0xff]
    %v184 = vld [vmem:[%s1 + $0x68] sm:$0xff]
    %v185 = vld [vmem:[%s1 + $0x70] sm:$0xff]
    %v186 = vld [vmem:[%s1 + $0x78] sm:$0xff]
    %v187 = vld [vmem:[%s1 + $0x80] sm:$0xff]
    %v188 = vld [vmem:[%s1 + $0x88] sm:$0xff]
    %v189 = vld [vmem:[%s1 + $0x90] sm:$0xff]
    %v190 = vld [vmem:[%s1 + $0x98] sm:$0xff]
    %v191 = vld [vmem:[%s1 + $0xa0] sm:$0xff]
    %v192 = vld [vmem:[%s1 + $0xa8] sm:$0xff]
    %v193 = vld [vmem:[%s1 + $0xb0] sm:$0xff]
    %v194 = vld [vmem:[%s1 + $0xb8] sm:$0xff]
    %195 = vmatprep.subr.mxu0 0.0
    %196 = vmatpush1.msra.mxu0 %v186
    %197 = vmatprep.subr.mxu0 0.0
    %198 = vmatpush1.msra.mxu0 %v185
    %199 = vmatprep.subr.mxu0 0.0
    %200 = vmatpush1.msra.mxu0 %v184
    %201 = vmatprep.subr.mxu0 0.0
    %202 = vmatpush1.msra.mxu0 %v183
    %203 = vmatprep.subr.mxu0 0.0
    %204 = vmatpush1.msra.mxu0 %v182
    %205 = vmatprep.subr.mxu0 0.0
    %206 = vmatpush1.msra.mxu0 %v181
    %207 = vmatprep.subr.mxu0 0.0
    %208 = vmatpush1.msra.mxu0 %v180
    %209 = vmatprep.subr.mxu0 0.0
    %210 = vmatpush1.msra.mxu0 %v179
    %211 = vmatprep.subr.mxu0 0.0
    %212 = vmatpush1.msra.mxu0 %v178
    %213 = vmatprep.subr.mxu0 0.0
    %214 = vmatpush1.msra.mxu0 %v177
    %215 = vmatprep.subr.mxu0 0.0
    %216 = vmatpush1.msra.mxu0 %v176
    %217 = vmatprep.subr.mxu0 0.0
    %218 = vmatpush1.msra.mxu0 %v175
    %219 = vmatprep.subr.mxu0 0.0
    %220 = vmatpush1.msra.mxu0 %v174
    %221 = vmatprep.subr.mxu0 0.0
    %222 = vmatpush1.msra.mxu0 %v173
    %223 = vmatprep.subr.mxu0 0.0
    %224 = vmatpush1.msra.mxu0 %v172
    %225 = vmatprep.subr.mxu0 0.0
    %226 = vmatpush1.msra.mxu0 %v171
    %227 = vmatprep.subr.mxu0 0.0
    %228 = vmatpush2.msra.mxu0 0.0
    %229 = vmatprep.subr.mxu0 0.0
    %230 = vmatpush2.msra.mxu0 0.0
    %231 = vmatprep.subr.mxu0 0.0
    %232 = vmatpush2.msra.mxu0 0.0
    %233 = vmatprep.subr.mxu0 0.0
    %234 = vmatpush2.msra.mxu0 0.0
    %235 = vmatprep.subr.mxu0 0.0
    %236 = vmatpush2.msra.mxu0 0.0
    %237 = vmatprep.subr.mxu0 0.0
    %238 = vmatpush2.msra.mxu0 0.0
    %239 = vmatprep.subr.mxu0 0.0
    %240 = vmatpush2.msra.mxu0 0.0
    %241 = vmatprep.subr.mxu0 0.0
    %242 = vmatpush2.msra.mxu0 0.0
    %243 = vmatprep.subr.mxu0 0.0
    %244 = vmatpush2.msra.mxu0 0.0
    %245 = vmatprep.subr.mxu0 0.0
    %246 = vmatpush2.msra.mxu0 0.0
    %247 = vmatprep.subr.mxu0 0.0
    %248 = vmatpush2.msra.mxu0 0.0
    %249 = vmatprep.subr.mxu0 0.0
    %250 = vmatpush2.msra.mxu0 0.0
    %251 = vmatprep.subr.mxu0 0.0
    %252 = vmatpush2.msra.mxu0 0.0
    %253 = vmatprep.subr.mxu0 0.0
    %254 = vmatpush2.msra.mxu0 0.0
    %255 = vmatprep.subr.mxu0 0.0
    %256 = vmatpush2.msra.mxu0 0.0
    %257 = vmatprep.subr.mxu0 0.0
    %258 = vmatpush2.msra.mxu0 0.0
    %259 = vmatprep.mubr.f32.mxu0 0.0
    %260 = vmatmul.mubr.f32.gmra.mxu0 %v125
    %v261 = vpop.f32.mrf.mxu0
    %v262 = vadd.f32 %v187, %v261
    %v263 = vpop.f32.mrf.mxu0
    %264 = vmatprep.mubr.f32.mxu0 0.0
    %265 = vmatmul.mubr.f32.gmra.mxu0 %v131
    %v266 = vpop.f32.mrf.mxu0
    %v267 = vadd.f32 %v188, %v266
    %v268 = vpop.f32.mrf.mxu0
    %269 = vmatprep.mubr.f32.mxu0 0.0
    %270 = vmatmul.mubr.f32.gmra.mxu0 %v137
    %v271 = vpop.f32.mrf.mxu0
    %v272 = vadd.f32 %v189, %v271
    %v273 = vpop.f32.mrf.mxu0
    %274 = vmatprep.mubr.f32.mxu0 0.0
    %275 = vmatmul.mubr.f32.gmra.mxu0 %v143
    %v276 = vpop.f32.mrf.mxu0
    %v277 = vadd.f32 %v190, %v276
    %v278 = vpop.f32.mrf.mxu0
    %279 = vmatprep.mubr.f32.mxu0 0.0
    %280 = vmatmul.mubr.f32.gmra.mxu0 %v149
    %v281 = vpop.f32.mrf.mxu0
    %v282 = vadd.f32 %v191, %v281
    %v283 = vpop.f32.mrf.mxu0
    %284 = vmatprep.mubr.f32.mxu0 0.0
    %285 = vmatmul.mubr.f32.gmra.mxu0 %v155
    %v286 = vpop.f32.mrf.mxu0
    %v287 = vadd.f32 %v192, %v286
    %v288 = vpop.f32.mrf.mxu0
    %289 = vmatprep.mubr.f32.mxu0 0.0
    %290 = vmatmul.mubr.f32.gmra.mxu0 %v161
    %v291 = vpop.f32.mrf.mxu0
    %v292 = vadd.f32 %v193, %v291
    %v293 = vpop.f32.mrf.mxu0
    %294 = vmatprep.mubr.f32.mxu0 0.0
    %295 = vmatmul.mubr.f32.gmra.mxu0 %v167
    %v296 = vpop.f32.mrf.mxu0
    %v297 = vadd.f32 %v194, %v296
    %v298 = vpop.f32.mrf.mxu0
    %299 = vdwg.mxu0
    %vm300 = vcmask 523264
    %v301 = vsel %vm300, %v262, -inf
    %302 = vmax.xlane.f32.xlu0 %v301
    %v303 = vpop.xlane.xlu0 %302
    %v304 = vsel %vm300, %v267, -inf
    %305 = vmax.xlane.f32.xlu0 %v304
    %v306 = vpop.xlane.xlu0 %305
    %v307 = vsel %vm300, %v272, -inf
    %308 = vmax.xlane.f32.xlu0 %v307
    %v309 = vpop.xlane.xlu0 %308
    %v310 = vsel %vm300, %v277, -inf
    %311 = vmax.xlane.f32.xlu0 %v310
    %v312 = vpop.xlane.xlu0 %311
    %v313 = vsel %vm300, %v282, -inf
    %314 = vmax.xlane.f32.xlu0 %v313
    %v315 = vpop.xlane.xlu0 %314
    %v316 = vsel %vm300, %v287, -inf
    %317 = vmax.xlane.f32.xlu0 %v316
    %v318 = vpop.xlane.xlu0 %317
    %v319 = vsel %vm300, %v292, -inf
    %320 = vmax.xlane.f32.xlu0 %v319
    %v321 = vpop.xlane.xlu0 %320
    %v322 = vsel %vm300, %v297, -inf
    %323 = vmax.xlane.f32.xlu0 %v322
    %v324 = vpop.xlane.xlu0 %323
    %v325 = vsub.f32 %v262, %v303
    %v326 = vsub.f32 %v267, %v306
    %v327 = vsub.f32 %v272, %v309
    %v328 = vsub.f32 %v277, %v312
    %v329 = vsub.f32 %v282, %v315
    %v330 = vsub.f32 %v287, %v318
    %v331 = vsub.f32 %v292, %v321
    %v332 = vsub.f32 %v297, %v324
    %v333 = vmul.f32 %v325, 1.442695
    %v334 = vpow.pop %v333
    %v335 = vmul.f32 %v326, 1.442695
    %v336 = vpow.pop %v335
    %v337 = vmul.f32 %v327, 1.442695
    %v338 = vpow.pop %v337
    %v339 = vmul.f32 %v328, 1.442695
    %v340 = vpow.pop %v339
    %v341 = vmul.f32 %v329, 1.442695
    %v342 = vpow.pop %v341
    %v343 = vmul.f32 %v330, 1.442695
    %v344 = vpow.pop %v343
    %v345 = vmul.f32 %v331, 1.442695
    %v346 = vpow.pop %v345
    %v347 = vmul.f32 %v332, 1.442695
    %v348 = vpow.pop %v347
    %v349 = vsel %vm300, %v334, 0.0
    %350 = vadd.xlane.f32.xlu0 %v349
    %v351 = vpop.xlane.xlu0 %350
    %v352 = vsel %vm300, %v336, 0.0
    %353 = vadd.xlane.f32.xlu0 %v352
    %v354 = vpop.xlane.xlu0 %353
    %v355 = vsel %vm300, %v338, 0.0
    %356 = vadd.xlane.f32.xlu0 %v355
    %v357 = vpop.xlane.xlu0 %356
    %v358 = vsel %vm300, %v340, 0.0
    %359 = vadd.xlane.f32.xlu0 %v358
    %v360 = vpop.xlane.xlu0 %359
    %v361 = vsel %vm300, %v342, 0.0
    %362 = vadd.xlane.f32.xlu0 %v361
    %v363 = vpop.xlane.xlu0 %362
    %v364 = vsel %vm300, %v344, 0.0
    %365 = vadd.xlane.f32.xlu0 %v364
    %v366 = vpop.xlane.xlu0 %365
    %v367 = vsel %vm300, %v346, 0.0
    %368 = vadd.xlane.f32.xlu0 %v367
    %v369 = vpop.xlane.xlu0 %368
    %v370 = vsel %vm300, %v348, 0.0
    %371 = vadd.xlane.f32.xlu0 %v370
    %v372 = vpop.xlane.xlu0 %371
    %v373 = vrcp.pop %v351
    %v374 = vrcp.pop %v354
    %v375 = vrcp.pop %v357
    %v376 = vrcp.pop %v360
    %v377 = vrcp.pop %v363
    %v378 = vrcp.pop %v366
    %v379 = vrcp.pop %v369
    %v380 = vrcp.pop %v372
    %v381 = vmul.f32 %v334, %v373
    %v382 = vmul.f32 %v336, %v374
    %v383 = vmul.f32 %v338, %v375
    %v384 = vmul.f32 %v340, %v376
    %v385 = vmul.f32 %v342, %v377
    %v386 = vmul.f32 %v344, %v378
    %v387 = vmul.f32 %v346, %v379
    %v388 = vmul.f32 %v348, %v380
    %v390 = vsel %vm300, %v381, 0
    %v393 = vsel %vm300, %v382, 0
    %v396 = vsel %vm300, %v383, 0
    %v399 = vsel %vm300, %v384, 0
    %v402 = vsel %vm300, %v385, 0
    %v405 = vsel %vm300, %v386, 0
    %v408 = vsel %vm300, %v387, 0
    %v411 = vsel %vm300, %v388, 0
    %413 = vmatprep.subr.mxu0 0.0
    %414 = vmatpush1.msra.mxu0 0.0
    %415 = vmatprep.subr.mxu0 0.0
    %416 = vmatpush1.msra.mxu0 0.0
    %417 = vmatprep.subr.mxu0 0.0
    %418 = vmatpush1.msra.mxu0 0.0
    %419 = vmatprep.subr.mxu0 0.0
    %420 = vmatpush1.msra.mxu0 0.0
    %421 = vmatprep.subr.mxu0 0.0
    %422 = vmatpush1.msra.mxu0 0.0
    %423 = vmatprep.subr.mxu0 0.0
    %424 = vmatpush1.msra.mxu0 0.0
    %425 = vmatprep.subr.mxu0 0.0
    %426 = vmatpush1.msra.mxu0 0.0
    %427 = vmatprep.subr.mxu0 0.0
    %428 = vmatpush1.msra.mxu0 0.0
    %429 = vmatprep.subr.mxu0 0.0
    %430 = vmatpush1.msra.mxu0 %v169
    %431 = vmatprep.subr.mxu0 0.0
    %432 = vmatpush1.msra.mxu0 %v163
    %433 = vmatprep.subr.mxu0 0.0
    %434 = vmatpush1.msra.mxu0 %v157
    %435 = vmatprep.subr.mxu0 0.0
    %436 = vmatpush1.msra.mxu0 %v151
    %437 = vmatprep.subr.mxu0 0.0
    %438 = vmatpush1.msra.mxu0 %v145
    %439 = vmatprep.subr.mxu0 0.0
    %440 = vmatpush1.msra.mxu0 %v139
    %441 = vmatprep.subr.mxu0 0.0
    %442 = vmatpush1.msra.mxu0 %v133
    %443 = vmatprep.subr.mxu0 0.0
    %444 = vmatpush1.msra.mxu0 %v127
    %445 = vmatprep.subr.mxu0 0.0
    %446 = vmatpush2.msra.mxu0 0.0
    %447 = vmatprep.subr.mxu0 0.0
    %448 = vmatpush2.msra.mxu0 0.0
    %449 = vmatprep.subr.mxu0 0.0
    %450 = vmatpush2.msra.mxu0 0.0
    %451 = vmatprep.subr.mxu0 0.0
    %452 = vmatpush2.msra.mxu0 0.0
    %453 = vmatprep.subr.mxu0 0.0
    %454 = vmatpush2.msra.mxu0 0.0
    %455 = vmatprep.subr.mxu0 0.0
    %456 = vmatpush2.msra.mxu0 0.0
    %457 = vmatprep.subr.mxu0 0.0
    %458 = vmatpush2.msra.mxu0 0.0
    %459 = vmatprep.subr.mxu0 0.0
    %460 = vmatpush2.msra.mxu0 0.0
    %461 = vmatprep.subr.mxu0 0.0
    %462 = vmatpush2.msra.mxu0 0.0
    %463 = vmatprep.subr.mxu0 0.0
    %464 = vmatpush2.msra.mxu0 0.0
    %465 = vmatprep.subr.mxu0 0.0
    %466 = vmatpush2.msra.mxu0 0.0
    %467 = vmatprep.subr.mxu0 0.0
    %468 = vmatpush2.msra.mxu0 0.0
    %469 = vmatprep.subr.mxu0 0.0
    %470 = vmatpush2.msra.mxu0 0.0
    %471 = vmatprep.subr.mxu0 0.0
    %472 = vmatpush2.msra.mxu0 0.0
    %473 = vmatprep.subr.mxu0 0.0
    %474 = vmatpush2.msra.mxu0 0.0
    %475 = vmatprep.subr.mxu0 0.0
    %476 = vmatpush2.msra.mxu0 0.0
    %477 = vmatprep.mubr.f32.mxu0 0.0
    %478 = vmatmul.mubr.f32.gmra.mxu0 %v390
    %v479 = vpop.f32.mrf.mxu0
    %v480 = vadd.f32 0.0, %v479
    %v481 = vpop.f32.mrf.mxu0
    %482 = vmatprep.mubr.f32.mxu0 0.0
    %483 = vmatmul.mubr.f32.gmra.mxu0 %v393
    %v484 = vpop.f32.mrf.mxu0
    %v485 = vadd.f32 0.0, %v484
    %v486 = vpop.f32.mrf.mxu0
    %487 = vmatprep.mubr.f32.mxu0 0.0
    %488 = vmatmul.mubr.f32.gmra.mxu0 %v396
    %v489 = vpop.f32.mrf.mxu0
    %v490 = vadd.f32 0.0, %v489
    %v491 = vpop.f32.mrf.mxu0
    %492 = vmatprep.mubr.f32.mxu0 0.0
    %493 = vmatmul.mubr.f32.gmra.mxu0 %v399
    %v494 = vpop.f32.mrf.mxu0
    %v495 = vadd.f32 0.0, %v494
    %v496 = vpop.f32.mrf.mxu0
    %497 = vmatprep.mubr.f32.mxu0 0.0
    %498 = vmatmul.mubr.f32.gmra.mxu0 %v402
    %v499 = vpop.f32.mrf.mxu0
    %v500 = vadd.f32 0.0, %v499
    %v501 = vpop.f32.mrf.mxu0
    %502 = vmatprep.mubr.f32.mxu0 0.0
    %503 = vmatmul.mubr.f32.gmra.mxu0 %v405
    %v504 = vpop.f32.mrf.mxu0
    %v505 = vadd.f32 0.0, %v504
    %v506 = vpop.f32.mrf.mxu0
    %507 = vmatprep.mubr.f32.mxu0 0.0
    %508 = vmatmul.mubr.f32.gmra.mxu0 %v408
    %v509 = vpop.f32.mrf.mxu0
    %v510 = vadd.f32 0.0, %v509
    %v511 = vpop.f32.mrf.mxu0
    %512 = vmatprep.mubr.f32.mxu0 0.0
    %513 = vmatmul.mubr.f32.gmra.mxu0 %v411
    %v514 = vpop.f32.mrf.mxu0
    %v515 = vadd.f32 0.0, %v514
    %v516 = vpop.f32.mrf.mxu0
    %517 = vdwg.mxu0
    %v518 = vadd.f32 %v480, %v490
    %v519 = vadd.f32 %v485, %v495
    %v520 = vadd.f32 %v518, %v500
    %v521 = vadd.f32 %v519, %v505
    %v522 = vadd.f32 %v520, %v510
    %v523 = vadd.f32 %v521, %v515
    %v524 = vld [vmem:[%s3] sm:$0xff]
    %v525 = vld [vmem:[%s3 + $0x8] sm:$0xff]
    %v526 = vld [vmem:[%s3 + $0x10] sm:$0xff]
    %v527 = vld [vmem:[%s3 + $0x18] sm:$0xff]
    %v528 = vld [vmem:[%s3 + $0x20] sm:$0x1]
    %v529 = vlaneseq
    %v530 = vshrl.u32 %v529, 7
    %v531 = vsub.s32 0, %v530
    %v532 = vrot.slane %v528, %v531
    %vm533 = vcmask 261120
    %v535 = vsel %vm533, %v522, 0
    %v538 = vsel %vm533, %v523, 0
    %540 = vmatprep.subr.mxu0 0.0
    %541 = vmatpush1.msra.mxu0 0.0
    %542 = vmatprep.subr.mxu0 0.0
    %543 = vmatpush1.msra.mxu0 0.0
    %544 = vmatprep.subr.mxu0 0.0
    %545 = vmatpush1.msra.mxu0 0.0
    %546 = vmatprep.subr.mxu0 0.0
    %547 = vmatpush1.msra.mxu0 0.0
    %548 = vmatprep.subr.mxu0 0.0
    %549 = vmatpush1.msra.mxu0 0.0
    %550 = vmatprep.subr.mxu0 0.0
    %551 = vmatpush1.msra.mxu0 0.0
    %552 = vmatprep.subr.mxu0 0.0
    %553 = vmatpush1.msra.mxu0 0.0
    %554 = vmatprep.subr.mxu0 0.0
    %555 = vmatpush1.msra.mxu0 0.0
    %556 = vmatprep.subr.mxu0 0.0
    %557 = vmatpush1.msra.mxu0 0.0
    %558 = vmatprep.subr.mxu0 0.0
    %559 = vmatpush1.msra.mxu0 0.0
    %560 = vmatprep.subr.mxu0 0.0
    %561 = vmatpush1.msra.mxu0 0.0
    %562 = vmatprep.subr.mxu0 0.0
    %563 = vmatpush1.msra.mxu0 0.0
    %564 = vmatprep.subr.mxu0 0.0
    %565 = vmatpush1.msra.mxu0 %v527
    %566 = vmatprep.subr.mxu0 0.0
    %567 = vmatpush1.msra.mxu0 %v526
    %568 = vmatprep.subr.mxu0 0.0
    %569 = vmatpush1.msra.mxu0 %v525
    %570 = vmatprep.subr.mxu0 0.0
    %571 = vmatpush1.msra.mxu0 %v524
    %572 = vmatprep.subr.mxu0 0.0
    %573 = vmatpush2.msra.mxu0 0.0
    %574 = vmatprep.subr.mxu0 0.0
    %575 = vmatpush2.msra.mxu0 0.0
    %576 = vmatprep.subr.mxu0 0.0
    %577 = vmatpush2.msra.mxu0 0.0
    %578 = vmatprep.subr.mxu0 0.0
    %579 = vmatpush2.msra.mxu0 0.0
    %580 = vmatprep.subr.mxu0 0.0
    %581 = vmatpush2.msra.mxu0 0.0
    %582 = vmatprep.subr.mxu0 0.0
    %583 = vmatpush2.msra.mxu0 0.0
    %584 = vmatprep.subr.mxu0 0.0
    %585 = vmatpush2.msra.mxu0 0.0
    %586 = vmatprep.subr.mxu0 0.0
    %587 = vmatpush2.msra.mxu0 0.0
    %588 = vmatprep.subr.mxu0 0.0
    %589 = vmatpush2.msra.mxu0 0.0
    %590 = vmatprep.subr.mxu0 0.0
    %591 = vmatpush2.msra.mxu0 0.0
    %592 = vmatprep.subr.mxu0 0.0
    %593 = vmatpush2.msra.mxu0 0.0
    %594 = vmatprep.subr.mxu0 0.0
    %595 = vmatpush2.msra.mxu0 0.0
    %596 = vmatprep.subr.mxu0 0.0
    %597 = vmatpush2.msra.mxu0 0.0
    %598 = vmatprep.subr.mxu0 0.0
    %599 = vmatpush2.msra.mxu0 0.0
    %600 = vmatprep.subr.mxu0 0.0
    %601 = vmatpush2.msra.mxu0 0.0
    %602 = vmatprep.subr.mxu0 0.0
    %603 = vmatpush2.msra.mxu0 0.0
    %604 = vmatprep.mubr.f32.mxu0 0.0
    %605 = vmatmul.mubr.f32.gmra.mxu0 %v535
    %v606 = vpop.f32.mrf.mxu0
    %v607 = vadd.f32 %v532, %v606
    %v608 = vpop.f32.mrf.mxu0
    %609 = vmatprep.mubr.f32.mxu0 0.0
    %610 = vmatmul.mubr.f32.gmra.mxu0 %v538
    %v611 = vpop.f32.mrf.mxu0
    %v612 = vadd.f32 %v532, %v611
    %v613 = vpop.f32.mrf.mxu0
    %614 = vdwg.mxu0
    %615 = vst [vmem:[#allocation2] sm:$0xff] %v607
    %616 = vst [vmem:[#allocation2 + $0x8] sm:$0xff] %v612
    // Predicated region
    $region18: #{bigram_lm_v5_forward.1} parent=1 // pred_check
      _
    $region19: #{bigram_lm_v5_forward.1} parent=1 // pred_check_branch
      %618 = sbr.rel (0) target = $region21
    $region20: #{bigram_lm_v5_forward.1} parent=1 // pred_region
      %s620 = ssub.s32 256, 256
      %621 = vsyncadd [#allocation3], %s620
      %s622 = sshll.u32 [#allocation2], 4
      %s623 = int_to_ptr.vmem [resolvable:$true] %s622
      %628 = dma.vmem_to_hbm [thread:$0]  %s623, 256, %s4, [#allocation3], 128, 128, 8
    $region21: #{bigram_lm_v5_forward.1} parent=1 // pred_fallthru
      _
    // Predicated region
    $region22: #{bigram_lm_v5_forward.1} parent=1 // pred_check
      _
    $region23: #{bigram_lm_v5_forward.1} parent=1 // pred_check_branch
      %630 = sbr.rel (0) target = $region25
    $region24: #{bigram_lm_v5_forward.1} parent=1 // pred_region
      %631 = dma.done [#allocation3], 256
    $region25: #{bigram_lm_v5_forward.1} parent=1 // pred_fallthru
      _
    %632 = vsyncpa [#allocation3], 1

</llo_original>
